<compile_context>
chip_gen: v5e
topology: v5e:2x2
jax: 0.10.0
libtpu: 0.0.40
codegen_flags: <defaults>
</compile_context>

<pallas_src>
import jax
import jax.numpy as jnp
from jax import lax
from jax.experimental import pallas as pl
from jax.experimental.pallas import tpu as pltpu

S_SIZE, H1, H2, A_SIZE = 4, 12, 24, 3
LAYER_DIMS = ((S_SIZE, H1), (H1, H2), (H2, H2), (H2, H1), (H1, A_SIZE))  # (in, out)


def _round_up(n, m):
    return ((n + m - 1) // m) * m


# Packed-parameter block layout: layer i occupies rows
# [ROW_OFFS[i], ROW_OFFS[i]+out_i): W_i in cols [0, in_i), bias in col in_i.
ROW_OFFS = []
_r = 0
for _fi, _fo in LAYER_DIMS:
    ROW_OFFS.append(_r)
    _r += _round_up(_fo, 8)           # keep every layer's rows 8-aligned
P_ROWS = _r                            # 88
P_COLS = 128
CHUNK_COLS = 512                       # in-kernel strip-mine width (batch cols)
TB_CAP = 4096                          # max batch columns per grid step


def policy_kernel(x_ref, p_ref, o_ref):
    """One batch tile.  x_ref: (TB, s_size); p_ref: (88, 128) packed params;
    o_ref: (a_size, TB) lane-dense softmax output (batch on the lane axis)."""
    tb = x_ref.shape[0]                    # static
    chunk = min(tb, CHUNK_COLS)
    n_chunks = tb // chunk                 # tb is a power-of-two multiple of 128

    # Hoist the tiny parameter slices out of the chunk loop.  Weights go to
    # bf16 so every matmul is a single-pass MXU op; biases stay f32 and are
    # added to the f32 accumulator.
    w, b = [], []
    for li, (fi, fo) in enumerate(LAYER_DIMS):
        r0 = ROW_OFFS[li]
        w.append(p_ref[r0:r0 + fo, 0:fi].astype(jnp.bfloat16))   # (out, in)
        b.append(p_ref[r0:r0 + fo, fi:fi + 1])                    # (out, 1) f32

    # Strip-mine the batch tile into <=512-column chunks.  n_chunks is a small
    # static int, so this unrolled loop is equivalent to
    # lax.fori_loop(..., unroll=True) but with static, 128-aligned slice
    # offsets (no dynamic lane-dim stores for Mosaic to lower).
    for c in range(n_chunks):
        lo, hi = c * chunk, (c + 1) * chunk
        xb = x_ref[lo:hi, :].astype(jnp.bfloat16)                 # (chunk, 4)

        # Layer 1: contract the feature axis of BOTH operands so the batch
        # dimension lands on the 128-lane axis -> h: (12, chunk).
        h = lax.dot_general(w[0], xb, (((1,), (1,)), ((), ())),
                            preferred_element_type=jnp.float32) + b[0]
        h = jnp.maximum(h, 0.0)

        for li in range(1, 5):
            h = jnp.dot(w[li], h.astype(jnp.bfloat16),
                        preferred_element_type=jnp.float32) + b[li]
            if li < 4:                                            # no ReLU on fc5
                h = jnp.maximum(h, 0.0)

        logits = h                                                # (3, chunk)
        # Numerically-stable softmax over the class axis (torch dim=1);
        # exact divide so rows sum to 1 (approx reciprocal broke this before).
        m = jnp.max(logits, axis=0, keepdims=True)
        e = jnp.exp(logits - m)
        denom = jnp.sum(e, axis=0, keepdims=True)
        o_ref[:, lo:hi] = (e / denom).astype(o_ref.dtype)


def pack_params(params):
    """Pack [w1,b1,...,w5,b5] (W: (out,in), b: (out,1)) into one (8,128)-tile
    aligned f32 block.  Done once outside the kernel (like loading weights)."""
    blk = jnp.zeros((P_ROWS, P_COLS), jnp.float32)
    for li, (fi, fo) in enumerate(LAYER_DIMS):
        w_i, b_i = params[2 * li], params[2 * li + 1]
        r0 = ROW_OFFS[li]
        blk = blk.at[r0:r0 + fo, 0:fi].set(w_i)
        blk = blk.at[r0:r0 + fo, fi:fi + 1].set(b_i)
    return blk


def _pick_tile(b_pad):
    """Largest power-of-two multiple of 128 dividing b_pad, capped at TB_CAP
    and at b_pad//2 (grid >= 2 'parallel' steps for v7x's two TensorCores)
    whenever b_pad >= 256."""
    limit = TB_CAP if b_pad < 256 else min(TB_CAP, b_pad // 2)
    tb, t = 128, 128
    while t <= limit:
        if b_pad % t == 0:
            tb = t
        t *= 2
    return tb


def policy_forward(x, packed_params):
    """x: (B, s_size) f32; packed_params: (88, 128) from pack_params.
    Returns (B, a_size) softmax probabilities (PyTorch layout)."""
    B, s_size = x.shape
    assert s_size == S_SIZE and packed_params.shape == (P_ROWS, P_COLS)

    # Pad the batch only to the next multiple of 128 lanes (<=127 dead cols).
    B_pad = _round_up(B, 128)
    if B_pad != B:
        x = jnp.pad(x, ((0, B_pad - B), (0, 0)))

    TB = _pick_tile(B_pad)
    grid = (B_pad // TB,)

    cost = pl.CostEstimate(
        flops=2 * B_pad * sum(fi * fo for fi, fo in LAYER_DIMS),
        transcendentals=A_SIZE * B_pad,
        bytes_accessed=4 * (B_pad * (S_SIZE + A_SIZE) + P_ROWS * P_COLS),
    )

    out_t = pl.pallas_call(
        policy_kernel,
        out_shape=jax.ShapeDtypeStruct((A_SIZE, B_pad), jnp.float32),
        grid=grid,
        in_specs=[
            pl.BlockSpec((TB, S_SIZE), lambda i: (i, 0)),        # x: batch-tiled
            pl.BlockSpec((P_ROWS, P_COLS), lambda i: (0, 0)),    # params: resident
        ],
        out_specs=pl.BlockSpec((A_SIZE, TB), lambda i: (0, i)),  # lane-dense
        compiler_params=pltpu.CompilerParams(
            dimension_semantics=("parallel",)),
        cost_estimate=cost,
    )(x, packed_params)

    # Tiny (3, B) relayout back to the PyTorch (B, a_size) convention.
    return out_t[:, :B].T


# TODO(synk): Policy.act()'s Categorical sampling / log_prob is host-side
# control flow on top of forward(); it is intentionally not implemented as a
# kernel.


def make_params(key):
    """Deterministic synthetic nn.Linear-style params; W (out,in), b (out,1)."""
    params = []
    for fan_in, fan_out in LAYER_DIMS:
        key, kw, kb = jax.random.split(key, 3)
        bound = 1.0 / jnp.sqrt(fan_in)   # matches nn.Linear default init range
        w = jax.random.uniform(kw, (fan_out, fan_in), jnp.float32, -bound, bound)
        b = jax.random.uniform(kb, (fan_out, 1), jnp.float32, -bound, bound)
        params += [w, b]
    return params


def policy_forward_ref(x, params):
    """Pure-JAX f32 reference (batch-major math) for sanity checking."""
    h = x
    for i in range(0, 8, 2):
        h = jnp.maximum(h @ params[i].T + params[i + 1].T, 0.0)
    logits = h @ params[8].T + params[9].T
    return jax.nn.softmax(logits, axis=1)


if __name__ == "__main__":
    key = jax.random.PRNGKey(0)
    key, kx = jax.random.split(key)

    params = make_params(key)
    packed = pack_params(params)   # one-time parameter packing

    # Small batch (the Policy.act() path; batch=2 here).
    x_small = jax.random.normal(kx, (2, S_SIZE), jnp.float32)
    probs = jax.block_until_ready(policy_forward(x_small, packed))
    ref = policy_forward_ref(x_small, params)
    assert probs.shape == (2, A_SIZE)
    assert jnp.allclose(jnp.sum(probs, axis=1), 1.0, atol=1e-3), "rows must sum to 1"
    assert jnp.allclose(probs, ref, atol=1e-2), "small-batch mismatch vs f32 reference"

    # Larger batch exercising the multi-step pipelined grid + in-kernel chunks.
    key, kx2 = jax.random.split(key)
    x_big = jax.random.normal(kx2, (2048, S_SIZE), jnp.float32)
    probs_big = jax.block_until_ready(policy_forward(x_big, packed))
    ref_big = policy_forward_ref(x_big, params)
    assert probs_big.shape == (2048, A_SIZE)
    assert jnp.allclose(jnp.sum(probs_big, axis=1), 1.0, atol=1e-3)
    assert jnp.allclose(probs_big, ref_big, atol=1e-2), "large-batch mismatch vs f32 reference"

    print("KERNEL_OK")
</pallas_src>

<mosaic_0001>
module attributes {stable_mosaic.version = 11 : i64} {
  func.func @policy_kernel(%arg0: i32, %arg1: memref<128x4xf32, #tpu.memory_space<vmem>>, %arg2: memref<88x128xf32, #tpu.memory_space<vmem>>, %arg3: memref<3x128xf32, #tpu.memory_space<vmem>>) attributes {dimension_semantics = [#tpu.dimension_semantics<parallel>], iteration_bounds = array<i64: 1>, scalar_prefetch = 0 : i64, scratch_operands = 0 : i64, tpu.core_type = #tpu.core_type<tc>, window_params = [{transform_indices = @transform_0, window_bounds = array<i64: 128, 4>}, {pipeline_mode = #tpu.pipeline_mode<synchronous>, transform_indices = @transform_1, window_bounds = array<i64: 88, 128>}, {transform_indices = @transform_2, window_bounds = array<i64: 3, 128>}]} {
    %c0 = arith.constant 0 : index
    %c0_0 = arith.constant 0 : index
    %0 = vector.load %arg2[%c0, %c0_0] : memref<88x128xf32, #tpu.memory_space<vmem>>, vector<12x4xf32>
    %1 = arith.truncf %0 : vector<12x4xf32> to vector<12x4xbf16>
    %c0_1 = arith.constant 0 : index
    %c4 = arith.constant 4 : index
    %2 = vector.load %arg2[%c0_1, %c4] : memref<88x128xf32, #tpu.memory_space<vmem>>, vector<12x1xf32>
    %c16 = arith.constant 16 : index
    %c0_2 = arith.constant 0 : index
    %3 = vector.load %arg2[%c16, %c0_2] : memref<88x128xf32, #tpu.memory_space<vmem>>, vector<24x12xf32>
    %4 = arith.truncf %3 : vector<24x12xf32> to vector<24x12xbf16>
    %c16_3 = arith.constant 16 : index
    %c12 = arith.constant 12 : index
    %5 = vector.load %arg2[%c16_3, %c12] : memref<88x128xf32, #tpu.memory_space<vmem>>, vector<24x1xf32>
    %c40 = arith.constant 40 : index
    %c0_4 = arith.constant 0 : index
    %6 = vector.load %arg2[%c40, %c0_4] : memref<88x128xf32, #tpu.memory_space<vmem>>, vector<24x24xf32>
    %7 = arith.truncf %6 : vector<24x24xf32> to vector<24x24xbf16>
    %c40_5 = arith.constant 40 : index
    %c24 = arith.constant 24 : index
    %8 = vector.load %arg2[%c40_5, %c24] : memref<88x128xf32, #tpu.memory_space<vmem>>, vector<24x1xf32>
    %c64 = arith.constant 64 : index
    %c0_6 = arith.constant 0 : index
    %9 = vector.load %arg2[%c64, %c0_6] : memref<88x128xf32, #tpu.memory_space<vmem>>, vector<12x24xf32>
    %10 = arith.truncf %9 : vector<12x24xf32> to vector<12x24xbf16>
    %c64_7 = arith.constant 64 : index
    %c24_8 = arith.constant 24 : index
    %11 = vector.load %arg2[%c64_7, %c24_8] : memref<88x128xf32, #tpu.memory_space<vmem>>, vector<12x1xf32>
    %c80 = arith.constant 80 : index
    %c0_9 = arith.constant 0 : index
    %12 = vector.load %arg2[%c80, %c0_9] : memref<88x128xf32, #tpu.memory_space<vmem>>, vector<3x12xf32>
    %13 = arith.truncf %12 : vector<3x12xf32> to vector<3x12xbf16>
    %c80_10 = arith.constant 80 : index
    %c12_11 = arith.constant 12 : index
    %14 = vector.load %arg2[%c80_10, %c12_11] : memref<88x128xf32, #tpu.memory_space<vmem>>, vector<3x1xf32>
    %c0_12 = arith.constant 0 : index
    %c0_13 = arith.constant 0 : index
    %15 = vector.load %arg1[%c0_12, %c0_13] : memref<128x4xf32, #tpu.memory_space<vmem>>, vector<128x4xf32>
    %16 = arith.truncf %15 : vector<128x4xf32> to vector<128x4xbf16>
    %cst = arith.constant dense<0.000000e+00> : vector<12x128xf32>
    %17 = tpu.matmul %1, %16, %cst {dimension_numbers = #tpu.dot_dimension_numbers<[1], [1], [0], [0], [0, 0, 1, 0], [], []>} : vector<12x4xbf16>, vector<128x4xbf16>, vector<12x128xf32> -> vector<12x128xf32>
    %18 = vector.broadcast %2 : vector<12x1xf32> to vector<12x128xf32>
    %19 = arith.addf %17, %18 : vector<12x128xf32>
    %cst_14 = arith.constant 0.000000e+00 : f32
    %20 = vector.broadcast %cst_14 : f32 to vector<12x128xf32>
    %21 = arith.maximumf %19, %20 : vector<12x128xf32>
    %22 = arith.truncf %21 : vector<12x128xf32> to vector<12x128xbf16>
    %cst_15 = arith.constant dense<0.000000e+00> : vector<24x128xf32>
    %23 = tpu.matmul %4, %22, %cst_15 {dimension_numbers = #tpu.dot_dimension_numbers<[1], [0], [0], [1], [0, 0, 1, 1], [], []>} : vector<24x12xbf16>, vector<12x128xbf16>, vector<24x128xf32> -> vector<24x128xf32>
    %24 = vector.broadcast %5 : vector<24x1xf32> to vector<24x128xf32>
    %25 = arith.addf %23, %24 : vector<24x128xf32>
    %cst_16 = arith.constant 0.000000e+00 : f32
    %26 = vector.broadcast %cst_16 : f32 to vector<24x128xf32>
    %27 = arith.maximumf %25, %26 : vector<24x128xf32>
    %28 = arith.truncf %27 : vector<24x128xf32> to vector<24x128xbf16>
    %cst_17 = arith.constant dense<0.000000e+00> : vector<24x128xf32>
    %29 = tpu.matmul %7, %28, %cst_17 {dimension_numbers = #tpu.dot_dimension_numbers<[1], [0], [0], [1], [0, 0, 1, 1], [], []>} : vector<24x24xbf16>, vector<24x128xbf16>, vector<24x128xf32> -> vector<24x128xf32>
    %30 = vector.broadcast %8 : vector<24x1xf32> to vector<24x128xf32>
    %31 = arith.addf %29, %30 : vector<24x128xf32>
    %cst_18 = arith.constant 0.000000e+00 : f32
    %32 = vector.broadcast %cst_18 : f32 to vector<24x128xf32>
    %33 = arith.maximumf %31, %32 : vector<24x128xf32>
    %34 = arith.truncf %33 : vector<24x128xf32> to vector<24x128xbf16>
    %cst_19 = arith.constant dense<0.000000e+00> : vector<12x128xf32>
    %35 = tpu.matmul %10, %34, %cst_19 {dimension_numbers = #tpu.dot_dimension_numbers<[1], [0], [0], [1], [0, 0, 1, 1], [], []>} : vector<12x24xbf16>, vector<24x128xbf16>, vector<12x128xf32> -> vector<12x128xf32>
    %36 = vector.broadcast %11 : vector<12x1xf32> to vector<12x128xf32>
    %37 = arith.addf %35, %36 : vector<12x128xf32>
    %cst_20 = arith.constant 0.000000e+00 : f32
    %38 = vector.broadcast %cst_20 : f32 to vector<12x128xf32>
    %39 = arith.maximumf %37, %38 : vector<12x128xf32>
    %40 = arith.truncf %39 : vector<12x128xf32> to vector<12x128xbf16>
    %cst_21 = arith.constant dense<0.000000e+00> : vector<3x128xf32>
    %41 = tpu.matmul %13, %40, %cst_21 {dimension_numbers = #tpu.dot_dimension_numbers<[1], [0], [0], [1], [0, 0, 1, 1], [], []>} : vector<3x12xbf16>, vector<12x128xbf16>, vector<3x128xf32> -> vector<3x128xf32>
    %42 = vector.broadcast %14 : vector<3x1xf32> to vector<3x128xf32>
    %43 = arith.addf %41, %42 : vector<3x128xf32>
    %cst_22 = arith.constant dense<0xFF800000> : vector<128xf32>
    %44 = vector.multi_reduction <maximumf>, %43, %cst_22 [0] : vector<3x128xf32> to vector<128xf32>
    %45 = vector.shape_cast %44 : vector<128xf32> to vector<1x128xf32>
    %46 = vector.broadcast %45 : vector<1x128xf32> to vector<3x128xf32>
    %47 = arith.subf %43, %46 : vector<3x128xf32>
    %48 = math.exp %47 : vector<3x128xf32>
    %cst_23 = arith.constant dense<0.000000e+00> : vector<128xf32>
    %49 = vector.multi_reduction <add>, %48, %cst_23 [0] : vector<3x128xf32> to vector<128xf32>
    %50 = vector.shape_cast %49 : vector<128xf32> to vector<1x128xf32>
    %51 = vector.broadcast %50 : vector<1x128xf32> to vector<3x128xf32>
    %52 = arith.divf %48, %51 : vector<3x128xf32>
    %c0_24 = arith.constant 0 : index
    %c0_25 = arith.constant 0 : index
    %53 = vector.load %arg3[%c0_24, %c0_25] : memref<3x128xf32, #tpu.memory_space<vmem>>, vector<3x128xf32>
    tpu.vector_store %arg3[%c0_24, %c0_25], %52 {strides = array<i32>} : memref<3x128xf32, #tpu.memory_space<vmem>>, vector<3x128xf32>,
    return
  }
  func.func @transform_0(%arg0: i32) -> (i32, i32) {
    %c0_i32 = arith.constant 0 : i32
    %c0_i32_0 = arith.constant 0 : i32
    return %arg0, %c0_i32 : i32, i32
  }
  func.func @transform_1(%arg0: i32) -> (i32, i32) {
    %c0_i32 = arith.constant 0 : i32
    %c0_i32_0 = arith.constant 0 : i32
    %c0_i32_1 = arith.constant 0 : i32
    return %c0_i32, %c0_i32_0 : i32, i32
  }
  func.func @transform_2(%arg0: i32) -> (i32, i32) {
    %c0_i32 = arith.constant 0 : i32
    %c0_i32_0 = arith.constant 0 : i32
    return %c0_i32, %arg0 : i32, i32
  }
}

</mosaic_0001>

<llo_original>
// kernel: tpu_custom_call.1
$region0: #{tpu_custom_call.1}
  #allocation0 [shape = 'u32[]', space=smem, size = 0x4, offset = 0x4, fixed_abs, tag = 'smem constant byte address 0x4 - core index']
  #allocation1 [shape = 'u32[72,128]{1,0:T(1,128)}', space=vmem, size = 0x9000, scoped, tag = 'internal scratch']
  %s0 = inlined_call_operand.vmem [shape: f32[128,4], index: 0, kind: input, shape index: {}]
  %s1 = inlined_call_operand.vmem [shape: f32[88,128], index: 1, kind: input, shape index: {}]
  %s2 = inlined_call_operand.hbm [shape: f32[3,128], index: 2, kind: output, shape index: {}]
  %s3 = sld [smem:[#allocation0]]
  $region18: #{tpu_custom_call.1} parent=0
    _
  %s5 = ssub.s32 1, %s3
  %s6 = scalar_select 0, %s5, %s3
  $region1: #{tpu_custom_call.1} parent=0
    #allocation2 [shape = 'u8[2048]{0}', space=vmem, size = 0x800, scoped, tag = 'output window, operand 0, single buffered']
    #allocation3 [shape = 's32[1]{0}', space=sflag, size = 0x4, scoped, tag = 'scoped memory for tpu_custom_call.1']
    %7 = vsyncpa [#allocation3], 0
    // Predicated region
    $region2: #{tpu_custom_call.1} parent=1 // pred_check
      _
    $region3: #{tpu_custom_call.1} parent=1 // pred_check_branch
      %9 = sbr.rel (0) target = $region5
    $region4: #{tpu_custom_call.1} parent=1 // pred_region
      _
    $region5: #{tpu_custom_call.1} parent=1 // pred_fallthru
      _
    // Predicated region
    $region6: #{tpu_custom_call.1} parent=1 // pred_check
      _
    $region7: #{tpu_custom_call.1} parent=1 // pred_check_branch
      %11 = sbr.rel (0) target = $region9
    $region8: #{tpu_custom_call.1} parent=1 // pred_region
      _
    $region9: #{tpu_custom_call.1} parent=1 // pred_fallthru
      _
    %v13 = vld [vmem:[%s1] sm:$0xff]
    %v14 = vld [vmem:[%s1 + $0x8] sm:$0xf]
    %v15 = vpack.c.bf16 %v14, %v13
    %v16 = vld [vmem:[%s1 + $0x10] sm:$0xff]
    %v17 = vld [vmem:[%s1 + $0x18] sm:$0xff]
    %v18 = vld [vmem:[%s1 + $0x20] sm:$0xff]
    %v19 = vpack.c.bf16 %v17, %v16
    %v20 = vpack.c.bf16 %v18, %v18
    %v21 = vld [vmem:[%s1 + $0x28] sm:$0xff]
    %v22 = vld [vmem:[%s1 + $0x30] sm:$0xff]
    %v23 = vld [vmem:[%s1 + $0x38] sm:$0xff]
    %v24 = vpack.c.bf16 %v22, %v21
    %v25 = vpack.c.bf16 %v23, %v23
    %v26 = vld [vmem:[%s1 + $0x40] sm:$0xff]
    %v27 = vld [vmem:[%s1 + $0x48] sm:$0xf]
    %v28 = vpack.c.bf16 %v27, %v26
    %v29 = vld [vmem:[%s1 + $0x50] sm:$0x7]
    %v30 = vpack.c.bf16 %v29, %v29
    %v31 = vld [vmem:[%s0] sm:$0xff]
    %v32 = vld [vmem:[%s0 + $0x8] sm:$0xff]
    %v33 = vld [vmem:[%s0 + $0x10] sm:$0xff]
    %v34 = vld [vmem:[%s0 + $0x18] sm:$0xff]
    %v35 = vld [vmem:[%s0 + $0x20] sm:$0xff]
    %v36 = vld [vmem:[%s0 + $0x28] sm:$0xff]
    %v37 = vld [vmem:[%s0 + $0x30] sm:$0xff]
    %v38 = vld [vmem:[%s0 + $0x38] sm:$0xff]
    %v39 = vld [vmem:[%s0 + $0x40] sm:$0xff]
    %v40 = vld [vmem:[%s0 + $0x48] sm:$0xff]
    %v41 = vld [vmem:[%s0 + $0x50] sm:$0xff]
    %v42 = vld [vmem:[%s0 + $0x58] sm:$0xff]
    %v43 = vld [vmem:[%s0 + $0x60] sm:$0xff]
    %v44 = vld [vmem:[%s0 + $0x68] sm:$0xff]
    %v45 = vld [vmem:[%s0 + $0x70] sm:$0xff]
    %v46 = vld [vmem:[%s0 + $0x78] sm:$0xff]
    %v47 = vpack.c.bf16 %v32, %v31
    %v48 = vpack.c.bf16 %v34, %v33
    %v49 = vpack.c.bf16 %v36, %v35
    %v50 = vpack.c.bf16 %v38, %v37
    %v51 = vpack.c.bf16 %v40, %v39
    %v52 = vpack.c.bf16 %v42, %v41
    %v53 = vpack.c.bf16 %v44, %v43
    %v54 = vpack.c.bf16 %v46, %v45
    %56 = vset.pattern.permute.xlu0 4
    %57 = vperm.xlu0 %56, %v13
    %v58 = vpop.permute.xlu0 %57
    %61 = vset.pattern.permute.xlu0 4
    %62 = vperm.xlu0 %61, %v14
    %v63 = vpop.permute.xlu0 %62
    %vm65 = vcmask 31744
    %v67 = vsel %vm65, %v15, 0
    %v70 = vsel %vm65, %v47, 0
    %v73 = vsel %vm65, %v48, 0
    %v76 = vsel %vm65, %v49, 0
    %v79 = vsel %vm65, %v50, 0
    %v82 = vsel %vm65, %v51, 0
    %v85 = vsel %vm65, %v52, 0
    %v88 = vsel %vm65, %v53, 0
    %v91 = vsel %vm65, %v54, 0
    %93 = vmatpush.bf16.xpose.msra.mxu0 %v91
    %94 = vmatpush.bf16.xpose.msra.mxu0 %v88
    %95 = vmatpush.bf16.xpose.msra.mxu0 %v85
    %96 = vmatpush.bf16.xpose.msra.mxu0 %v82
    %97 = vmatpush.bf16.xpose.msra.mxu0 %v79
    %98 = vmatpush.bf16.xpose.msra.mxu0 %v76
    %99 = vmatpush.bf16.xpose.msra.mxu0 %v73
    %100 = vmatpush.bf16.xpose.msra.mxu0 %v70
    %101 = vmatmul.bf16.gmra.mxu0 %v67
    %v102 = vpop.f32.mrf.mxu0
    %v103 = vadd.f32 %v58, %v102
    %v104 = vpop.f32.mrf.mxu0
    %v105 = vadd.f32 %v63, %v104
    %106 = vdwg.mxu0
    %v107 = vmax.f32 %v103, 0.0
    %v108 = vmax.f32 %v105, 0.0
    %v109 = vpack.c.bf16 %v108, %v107
    %111 = vset.pattern.permute.xlu0 12
    %112 = vperm.xlu0 %111, %v16
    %v113 = vpop.permute.xlu0 %112
    %116 = vset.pattern.permute.xlu0 12
    %117 = vperm.xlu0 %116, %v17
    %v118 = vpop.permute.xlu0 %117
    %121 = vset.pattern.permute.xlu0 12
    %122 = vperm.xlu0 %121, %v18
    %v123 = vpop.permute.xlu0 %122
    %vm125 = vcmask 97280
    %v127 = vsel %vm125, %v19, 0
    %v130 = vsel %vm125, %v20, 0
    %vm132 = vcmask 1045504
    %v134 = vsel %vm132, %v109, 0
    %136 = vmatpush.bf16.msra.mxu0 0
    %137 = vmatpush.bf16.msra.mxu0 0
    %138 = vmatpush.bf16.msra.mxu0 0
    %139 = vmatpush.bf16.msra.mxu0 0
    %140 = vmatpush.bf16.msra.mxu0 0
    %141 = vmatpush.bf16.msra.mxu0 0
    %142 = vmatpush.bf16.msra.mxu0 0
    %143 = vmatpush.bf16.msra.mxu0 %v134
    %144 = vmatmul.bf16.gmra.mxu0 %v127
    %v145 = vpop.f32.mrf.mxu0
    %v146 = vadd.f32 %v113, %v145
    %v147 = vpop.f32.mrf.mxu0
    %v148 = vadd.f32 %v118, %v147
    %149 = vmatmul.bf16.gmra.mxu0 %v130
    %v150 = vpop.f32.mrf.mxu0
    %v151 = vadd.f32 %v123, %v150
    %v152 = vpop.f32.mrf.mxu0
    %153 = vdwg.mxu0
    %v154 = vmax.f32 %v146, 0.0
    %v155 = vmax.f32 %v148, 0.0
    %v156 = vmax.f32 %v151, 0.0
    %v157 = vpack.c.bf16 %v155, %v154
    %v158 = vpack.c.bf16 %v156, %v156
    %160 = vset.pattern.permute.xlu0 24
    %161 = vperm.xlu0 %160, %v21
    %v162 = vpop.permute.xlu0 %161
    %165 = vset.pattern.permute.xlu0 24
    %166 = vperm.xlu0 %165, %v22
    %v167 = vpop.permute.xlu0 %166
    %170 = vset.pattern.permute.xlu0 24
    %171 = vperm.xlu0 %170, %v23
    %v172 = vpop.permute.xlu0 %171
    %vm174 = vcmask 195584
    %v176 = vsel %vm174, %v24, 0
    %v179 = vsel %vm174, %v25, 0
    %vm181 = vcmask 1043456
    %v183 = vsel %vm181, %v158, 0
    %185 = vmatpush.bf16.msra.mxu0 0
    %186 = vmatpush.bf16.msra.mxu0 0
    %187 = vmatpush.bf16.msra.mxu0 0
    %188 = vmatpush.bf16.msra.mxu0 0
    %189 = vmatpush.bf16.msra.mxu0 0
    %190 = vmatpush.bf16.msra.mxu0 0
    %191 = vmatpush.bf16.msra.mxu0 %v183
    %192 = vmatpush.bf16.msra.mxu0 %v157
    %193 = vmatmul.bf16.gmra.mxu0 %v176
    %v194 = vpop.f32.mrf.mxu0
    %v195 = vadd.f32 %v162, %v194
    %v196 = vpop.f32.mrf.mxu0
    %v197 = vadd.f32 %v167, %v196
    %198 = vmatmul.bf16.gmra.mxu0 %v179
    %v199 = vpop.f32.mrf.mxu0
    %v200 = vadd.f32 %v172, %v199
    %v201 = vpop.f32.mrf.mxu0
    %202 = vdwg.mxu0
    %v203 = vmax.f32 %v195, 0.0
    %v204 = vmax.f32 %v197, 0.0
    %v205 = vmax.f32 %v200, 0.0
    %v206 = vpack.c.bf16 %v204, %v203
    %v207 = vpack.c.bf16 %v205, %v205
    %209 = vset.pattern.permute.xlu0 24
    %210 = vperm.xlu0 %209, %v26
    %v211 = vpop.permute.xlu0 %210
    %214 = vset.pattern.permute.xlu0 24
    %215 = vperm.xlu0 %214, %v27
    %v216 = vpop.permute.xlu0 %215
    %v219 = vsel %vm174, %v28, 0
    %v222 = vsel %vm181, %v207, 0
    %224 = vmatpush.bf16.msra.mxu0 0
    %225 = vmatpush.bf16.msra.mxu0 0
    %226 = vmatpush.bf16.msra.mxu0 0
    %227 = vmatpush.bf16.msra.mxu0 0
    %228 = vmatpush.bf16.msra.mxu0 0
    %229 = vmatpush.bf16.msra.mxu0 0
    %230 = vmatpush.bf16.msra.mxu0 %v222
    %231 = vmatpush.bf16.msra.mxu0 %v206
    %232 = vmatmul.bf16.gmra.mxu0 %v219
    %v233 = vpop.f32.mrf.mxu0
    %v234 = vadd.f32 %v211, %v233
    %v235 = vpop.f32.mrf.mxu0
    %v236 = vadd.f32 %v216, %v235
    %237 = vdwg.mxu0
    %v238 = vmax.f32 %v234, 0.0
    %v239 = vmax.f32 %v236, 0.0
    %v240 = vpack.c.bf16 %v239, %v238
    %242 = vset.pattern.permute.xlu0 12
    %243 = vperm.xlu0 %242, %v29
    %v244 = vpop.permute.xlu0 %243
    %v247 = vsel %vm125, %v30, 0
    %v250 = vsel %vm132, %v240, 0
    %252 = vmatpush.bf16.msra.mxu0 0
    %253 = vmatpush.bf16.msra.mxu0 0
    %254 = vmatpush.bf16.msra.mxu0 0
    %255 = vmatpush.bf16.msra.mxu0 0
    %256 = vmatpush.bf16.msra.mxu0 0
    %257 = vmatpush.bf16.msra.mxu0 0
    %258 = vmatpush.bf16.msra.mxu0 0
    %259 = vmatpush.bf16.msra.mxu0 %v250
    %260 = vmatmul.bf16.gmra.mxu0 %v247
    %v261 = vpop.f32.mrf.mxu0
    %v262 = vadd.f32 %v244, %v261
    %v263 = vpop.f32.mrf.mxu0
    %264 = vdwg.mxu0
    %vm265 = vcmask 1042432
    %v266 = vsel %vm265, %v262, -inf
    %v267 = vrot.slane %v266, 4
    %v268 = vmax.f32 %v266, %v267
    %v269 = vrot.slane %v268, 2
    %v270 = vmax.f32 %v268, %v269
    %v271 = vrot.slane %v270, 1
    %v272 = vmax.f32 %v270, %v271
    %v273 = vsub.f32 %v262, %v272
    %v274 = vmul.f32 %v273, 1.442695
    %v275 = vpow.pop %v274
    %v276 = vsel %vm265, %v275, 0.0
    %v277 = vrot.slane %v276, 4
    %v278 = vadd.f32 %v276, %v277
    %v279 = vrot.slane %v278, 2
    %v280 = vadd.f32 %v278, %v279
    %v281 = vrot.slane %v280, 1
    %v282 = vadd.f32 %v280, %v281
    %v283 = vrcp.pop %v282
    %v284 = vmul.f32 %v282, %v283
    %v285 = vsub.f32 1.0, %v284
    %v286 = vmul.f32 %v283, %v285
    %v287 = vadd.f32 %v283, %v286
    %vm288 = vweird.f32 %v282
    %vm289 = vweird.f32 %v283
    %vm290 = vmor %vm288, %vm289
    %v291 = vsel %vm290, %v283, %v287
    %v292 = vand.u32 2147483647, %v282
    %vm293 = vcmp.eq.f32.partialorder %v292, 8.507059e+37
    %v294 = vand.u32 %v282, 2147483648
    %v295 = vor.u32 1.1754944e-38, %v294
    %v296 = vsel %vm293, %v295, %v291
    %v297 = vmul.f32 %v275, %v296
    %298 = vst [vmem:[#allocation2] sm:$0x7] %v297
    // Predicated region
    $region10: #{tpu_custom_call.1} parent=1 // pred_check
      _
    $region11: #{tpu_custom_call.1} parent=1 // pred_check_branch
      %300 = sbr.rel (0) target = $region13
    $region12: #{tpu_custom_call.1} parent=1 // pred_region
      %302 = vsyncadd [#allocation3], 0
      %s304 = sshll.u32 [#allocation2], 4
      %s305 = int_to_ptr.vmem [resolvable:$true] %s304
      %s306 = sshll.u32 %s2, 4
      %s307 = int_to_ptr.hbm [resolvable:$true] %s306
      %309 = dma.vmem_to_hbm [thread:$0]  %s305, 64, %s307, [#allocation3]
    $region13: #{tpu_custom_call.1} parent=1 // pred_fallthru
      _
    // Predicated region
    $region14: #{tpu_custom_call.1} parent=1 // pred_check
      _
    $region15: #{tpu_custom_call.1} parent=1 // pred_check_branch
      %311 = sbr.rel (0) target = $region17
    $region16: #{tpu_custom_call.1} parent=1 // pred_region
      %313 = dma.done [#allocation3], 64
    $region17: #{tpu_custom_call.1} parent=1 // pred_fallthru
      _
    %314 = vsyncpa [#allocation3], 1

</llo_original>
